<compile_context>
chip_gen: v6e
topology: v6e:2x2x1
jax: 0.10.0
libtpu: 0.0.40
codegen_flags: <defaults>
</compile_context>

<pallas_src>
import functools
import math

import jax
import jax.numpy as jnp
from jax.experimental import pallas as pl
from jax.experimental.pallas import tpu as pltpu

_MIB = 1024 * 1024


def _round_up(x: int, m: int) -> int:
    return ((x + m - 1) // m) * m


def _tpu_memory_params():
    """(vmem_capacity_bytes, vmem_limit_bytes) - generation aware, safe fallback."""
    try:
        vmem_cap = int(pltpu.get_tpu_info().vmem_capacity_bytes)
    except Exception:
        vmem_cap = 64 * _MIB  # conservative: v7x per-core VMEM
    if vmem_cap >= 100 * _MIB:            # v5e / v6e: 128 MiB physical
        vmem_limit = 96 * _MIB
    else:                                  # v7x: 64 MiB physical per core
        vmem_limit = max(32 * _MIB, vmem_cap - 8 * _MIB)
    return vmem_cap, vmem_limit


def _pick_tile_rows(n_rows: int, width: int, itemsize: int, sublane: int,
                    vmem_limit: int, two_tc: bool) -> int:
    """Largest sublane-multiple row tile fitting the VMEM budget model.

    Budget model per row: double-buffered input + output tiles (4*itemsize)
    plus ~3 f32-wide in-kernel temporaries. On 2-TC chips we nudge the grid to
    an even number of steps so both cores get work.
    """
    if n_rows < sublane:
        return n_rows                      # block == full dim (always legal)
    per_row = width * (4 * itemsize + 3 * 4)
    budget = max(vmem_limit - 16 * _MIB, vmem_limit // 2)
    tr = max(sublane, (budget // per_row) // sublane * sublane)
    tr = min(tr, (n_rows // sublane) * sublane)   # never exceed the array
    if two_tc:
        n_blocks = -(-n_rows // tr)
        if n_blocks == 1 and n_rows >= 2 * sublane:
            n_blocks = 2
        elif n_blocks > 1 and n_blocks % 2 == 1:
            n_blocks += 1
        tr2 = max(sublane, _round_up(-(-n_rows // n_blocks), sublane))
        tr2 = min(tr2, (n_rows // sublane) * sublane)
        if -(-n_rows // tr2) % 2 == 0:     # only accept if it really ends up even
            tr = min(tr, tr2)
    return tr


def _ln_rowwise_kernel(x_ref, alpha_ref, bias_ref, o_ref, *, eps: float):
    # x_ref: (tr, F);  alpha_ref / bias_ref: (1, F). Two-pass mean/var in f32.
    x = x_ref[...].astype(jnp.float32)
    n = x.shape[-1]
    mean = jnp.sum(x, axis=-1, keepdims=True) * (1.0 / n)
    d = x - mean
    # unbiased variance (torch.std default); n == 1 -> NaN like torch.
    var = jnp.sum(d * d, axis=-1, keepdims=True) * (1.0 / (n - 1))
    inv = pl.reciprocal(jnp.sqrt(var) + jnp.float32(eps), approx=False)
    alpha = alpha_ref[...].astype(jnp.float32)
    bias = bias_ref[...].astype(jnp.float32)
    o_ref[...] = (d * (alpha * inv) + bias).astype(o_ref.dtype)


def _ln_packed_kernel(x_ref, alpha_ref, bias_ref, seg_ref, o_ref, *,
                      eps: float, feat: int):
    # x_ref: (tr, 128) -- each kernel row packs 128//feat logical rows along lanes.
    # seg_ref: (128, 128) bf16 block-diagonal 0/1 matrix; x @ seg broadcasts each
    # lane's feat-sized segment sum back to every lane of that segment, using the
    # otherwise-idle MXU. f32 accuracy is kept with an exact hi/lo bf16 split
    # (2 single-pass bf16 matmuls per reduction instead of 6-pass HIGHEST dots).
    x = x_ref[...].astype(jnp.float32)
    seg = seg_ref[...]

    def seg_sum(v):
        hi = v.astype(jnp.bfloat16)
        lo = (v - hi.astype(jnp.float32)).astype(jnp.bfloat16)
        return (jnp.dot(hi, seg, preferred_element_type=jnp.float32)
                + jnp.dot(lo, seg, preferred_element_type=jnp.float32))

    mean = seg_sum(x) * (1.0 / feat)
    d = x - mean
    var = seg_sum(d * d) * (1.0 / (feat - 1))
    inv = pl.reciprocal(jnp.sqrt(var) + jnp.float32(eps), approx=False)
    o_ref[...] = (d * (alpha_ref[...] * inv) + bias_ref[...]).astype(o_ref.dtype)


def layer_normalization(x: jax.Array, alpha: jax.Array, bias: jax.Array,
                        eps: float = 1e-6) -> jax.Array:
    """LayerNorm over the last axis of x. alpha/bias have shape (features,)."""
    orig_shape = x.shape
    feat = orig_shape[-1]
    rows = math.prod(orig_shape[:-1]) if len(orig_shape) > 1 else 1
    x2 = x.reshape(rows, feat)

    vmem_cap, vmem_limit = _tpu_memory_params()
    two_tc = vmem_cap <= 80 * _MIB        # v7x-like (2 TensorCores per chip)
    itemsize = jnp.dtype(x.dtype).itemsize
    sublane = max(8, 32 // max(itemsize, 1))   # 8 f32 / 16 bf16 / 32 int8-fp8

    # Lane-dense packing for small feature dims. Only when it needs no padding
    # (rows % pack == 0) so we never pay an extra HBM pass for pad/slice.
    # (Non-divisor feats < 128 fall back to the rowwise path; generalizing the
    #  packing to those is a perf-only follow-up.)
    pack = 128 // feat if (1 < feat < 128 and 128 % feat == 0) else 1
    lane_packed = pack > 1 and rows % pack == 0
    if lane_packed:
        width = 128
        xk = x2.reshape(rows // pack, width)   # contiguous view: free
        alpha_k = jnp.tile(alpha.reshape(1, feat).astype(jnp.float32), (1, pack))
        bias_k = jnp.tile(bias.reshape(1, feat).astype(jnp.float32), (1, pack))
        lane = jnp.arange(width) // feat
        seg = (lane[:, None] == lane[None, :]).astype(jnp.bfloat16)
        kernel = functools.partial(_ln_packed_kernel, eps=eps, feat=feat)
        extra_in = [seg]
        extra_specs = [pl.BlockSpec((width, width), lambda i: (0, 0))]
    else:
        width = feat
        xk = x2
        alpha_k = alpha.reshape(1, feat)
        bias_k = bias.reshape(1, feat)
        kernel = functools.partial(_ln_rowwise_kernel, eps=eps)
        extra_in, extra_specs = [], []

    n_rows_k = xk.shape[0]
    tr = _pick_tile_rows(n_rows_k, width, itemsize, sublane, vmem_limit, two_tc)
    n_blocks = pl.cdiv(n_rows_k, tr)       # ragged tail handled by Pallas

    out = pl.pallas_call(
        kernel,
        out_shape=jax.ShapeDtypeStruct((n_rows_k, width), x.dtype),
        grid_spec=pltpu.PrefetchScalarGridSpec(
            num_scalar_prefetch=0,
            grid=(n_blocks,),
            in_specs=[pl.BlockSpec((tr, width), lambda i: (i, 0)),
                      pl.BlockSpec((1, width), lambda i: (0, 0)),
                      pl.BlockSpec((1, width), lambda i: (0, 0))] + extra_specs,
            out_specs=pl.BlockSpec((tr, width), lambda i: (i, 0)),
        ),
        compiler_params=pltpu.CompilerParams(
            dimension_semantics=("parallel",),
            vmem_limit_bytes=vmem_limit),
    )(xk, alpha_k, bias_k, *extra_in)

    if lane_packed:
        out = out.reshape(rows, feat)       # contiguous view: free
    return out.reshape(orig_shape)


def _reference(x, alpha, bias, eps):
    mean = jnp.mean(x, axis=-1, keepdims=True)
    n = x.shape[-1]
    std = jnp.sqrt(jnp.sum((x - mean) ** 2, axis=-1, keepdims=True) / (n - 1))
    return alpha * (x - mean) / (std + eps) + bias


if __name__ == "__main__":
    # Module: LayerNormalization(features=hidden). Input shaped (batch, seq, hidden).
    batch, seq, hidden = 2, 8, 32
    key = jax.random.PRNGKey(0)
    x = jax.random.normal(key, (batch, seq, hidden), dtype=jnp.float32)

    # torch default init: alpha = ones, bias = zeros.
    alpha = jnp.ones((hidden,), dtype=jnp.float32)
    bias = jnp.zeros((hidden,), dtype=jnp.float32)

    out = layer_normalization(x, alpha, bias, eps=1e-6)
    jax.block_until_ready(out)
    assert out.shape == x.shape and out.dtype == x.dtype
    assert jnp.allclose(out, _reference(x, alpha, bias, 1e-6),
                        atol=1e-4, rtol=1e-4), "mismatch (packed path)"

    # Generic rowwise path (feat >= 128) with a ragged last block (12 rows, tr=8).
    x2 = jax.random.normal(jax.random.PRNGKey(1), (4, 3, 256), dtype=jnp.float32)
    a2 = jnp.ones((256,), dtype=jnp.float32)
    b2 = jnp.zeros((256,), dtype=jnp.float32)
    out2 = layer_normalization(x2, a2, b2, eps=1e-6)
    jax.block_until_ready(out2)
    assert jnp.allclose(out2, _reference(x2, a2, b2, 1e-6),
                        atol=1e-4, rtol=1e-4), "mismatch (rowwise path)"

    # Small-feature fallback (rows not divisible by pack -> rowwise, no padding).
    x3 = jax.random.normal(jax.random.PRNGKey(2), (5, 32), dtype=jnp.float32)
    out3 = layer_normalization(x3, alpha, bias, eps=1e-6)
    jax.block_until_ready(out3)
    assert jnp.allclose(out3, _reference(x3, alpha, bias, 1e-6),
                        atol=1e-4, rtol=1e-4), "mismatch (fallback path)"

    print("KERNEL_OK")
</pallas_src>

<mosaic_0001>
module attributes {stable_mosaic.version = 11 : i64} {
  func.func @_ln_packed_kernel(%arg0: i32, %arg1: memref<4x128xf32, #tpu.memory_space<vmem>>, %arg2: memref<1x128xf32, #tpu.memory_space<vmem>>, %arg3: memref<1x128xf32, #tpu.memory_space<vmem>>, %arg4: memref<128x128xbf16, #tpu.memory_space<vmem>>, %arg5: memref<4x128xf32, #tpu.memory_space<vmem>>) attributes {dimension_semantics = [#tpu.dimension_semantics<parallel>], iteration_bounds = array<i64: 1>, scalar_prefetch = 0 : i64, scratch_operands = 0 : i64, tpu.core_type = #tpu.core_type<tc>, window_params = [{transform_indices = @transform_0, window_bounds = array<i64: 4, 128>}, {pipeline_mode = #tpu.pipeline_mode<synchronous>, transform_indices = @transform_1, window_bounds = array<i64: 1, 128>}, {pipeline_mode = #tpu.pipeline_mode<synchronous>, transform_indices = @transform_2, window_bounds = array<i64: 1, 128>}, {pipeline_mode = #tpu.pipeline_mode<synchronous>, transform_indices = @transform_3, window_bounds = array<i64: 128, 128>}, {transform_indices = @transform_4, window_bounds = array<i64: 4, 128>}]} {
    %c0 = arith.constant 0 : index
    %c0_0 = arith.constant 0 : index
    %0 = vector.load %arg1[%c0, %c0_0] : memref<4x128xf32, #tpu.memory_space<vmem>>, vector<4x128xf32>
    %c0_1 = arith.constant 0 : index
    %c0_2 = arith.constant 0 : index
    %1 = vector.load %arg4[%c0_1, %c0_2] : memref<128x128xbf16, #tpu.memory_space<vmem>>, vector<128x128xbf16>
    %2 = arith.truncf %0 : vector<4x128xf32> to vector<4x128xbf16>
    %3 = arith.extf %2 : vector<4x128xbf16> to vector<4x128xf32>
    %4 = arith.subf %0, %3 : vector<4x128xf32>
    %5 = arith.truncf %4 : vector<4x128xf32> to vector<4x128xbf16>
    %cst = arith.constant dense<0.000000e+00> : vector<4x128xf32>
    %6 = tpu.matmul %2, %1, %cst {dimension_numbers = #tpu.dot_dimension_numbers<[1], [0], [0], [1], [0, 0, 1, 1], [], []>} : vector<4x128xbf16>, vector<128x128xbf16>, vector<4x128xf32> -> vector<4x128xf32>
    %cst_3 = arith.constant dense<0.000000e+00> : vector<4x128xf32>
    %7 = tpu.matmul %5, %1, %cst_3 {dimension_numbers = #tpu.dot_dimension_numbers<[1], [0], [0], [1], [0, 0, 1, 1], [], []>} : vector<4x128xbf16>, vector<128x128xbf16>, vector<4x128xf32> -> vector<4x128xf32>
    %8 = arith.addf %6, %7 : vector<4x128xf32>
    %cst_4 = arith.constant 3.125000e-02 : f32
    %9 = vector.broadcast %cst_4 : f32 to vector<4x128xf32>
    %10 = arith.mulf %8, %9 : vector<4x128xf32>
    %11 = arith.subf %0, %10 : vector<4x128xf32>
    %12 = arith.mulf %11, %11 : vector<4x128xf32>
    %13 = arith.truncf %12 : vector<4x128xf32> to vector<4x128xbf16>
    %14 = arith.extf %13 : vector<4x128xbf16> to vector<4x128xf32>
    %15 = arith.subf %12, %14 : vector<4x128xf32>
    %16 = arith.truncf %15 : vector<4x128xf32> to vector<4x128xbf16>
    %cst_5 = arith.constant dense<0.000000e+00> : vector<4x128xf32>
    %17 = tpu.matmul %13, %1, %cst_5 {dimension_numbers = #tpu.dot_dimension_numbers<[1], [0], [0], [1], [0, 0, 1, 1], [], []>} : vector<4x128xbf16>, vector<128x128xbf16>, vector<4x128xf32> -> vector<4x128xf32>
    %cst_6 = arith.constant dense<0.000000e+00> : vector<4x128xf32>
    %18 = tpu.matmul %16, %1, %cst_6 {dimension_numbers = #tpu.dot_dimension_numbers<[1], [0], [0], [1], [0, 0, 1, 1], [], []>} : vector<4x128xbf16>, vector<128x128xbf16>, vector<4x128xf32> -> vector<4x128xf32>
    %19 = arith.addf %17, %18 : vector<4x128xf32>
    %cst_7 = arith.constant 0.0322580636 : f32
    %20 = vector.broadcast %cst_7 : f32 to vector<4x128xf32>
    %21 = arith.mulf %19, %20 : vector<4x128xf32>
    %22 = math.sqrt %21 : vector<4x128xf32>
    %cst_8 = arith.constant 9.99999997E-7 : f32
    %23 = vector.broadcast %cst_8 : f32 to vector<4x128xf32>
    %24 = arith.addf %22, %23 : vector<4x128xf32>
    %25 = tpu.reciprocal %24 : vector<4x128xf32> -> vector<4x128xf32>
    %c0_9 = arith.constant 0 : index
    %c0_10 = arith.constant 0 : index
    %26 = vector.load %arg2[%c0_9, %c0_10] : memref<1x128xf32, #tpu.memory_space<vmem>>, vector<1x128xf32>
    %27 = vector.broadcast %26 : vector<1x128xf32> to vector<4x128xf32>
    %28 = arith.mulf %27, %25 : vector<4x128xf32>
    %29 = arith.mulf %11, %28 : vector<4x128xf32>
    %c0_11 = arith.constant 0 : index
    %c0_12 = arith.constant 0 : index
    %30 = vector.load %arg3[%c0_11, %c0_12] : memref<1x128xf32, #tpu.memory_space<vmem>>, vector<1x128xf32>
    %31 = vector.broadcast %30 : vector<1x128xf32> to vector<4x128xf32>
    %32 = arith.addf %29, %31 : vector<4x128xf32>
    %c0_13 = arith.constant 0 : index
    %c0_14 = arith.constant 0 : index
    %33 = vector.load %arg5[%c0_13, %c0_14] : memref<4x128xf32, #tpu.memory_space<vmem>>, vector<4x128xf32>
    tpu.vector_store %arg5[%c0_13, %c0_14], %32 {strides = array<i32>} : memref<4x128xf32, #tpu.memory_space<vmem>>, vector<4x128xf32>,
    return
  }
  func.func @transform_0(%arg0: i32) -> (i32, i32) {
    %c0_i32 = arith.constant 0 : i32
    %c0_i32_0 = arith.constant 0 : i32
    return %arg0, %c0_i32 : i32, i32
  }
  func.func @transform_1(%arg0: i32) -> (i32, i32) {
    %c0_i32 = arith.constant 0 : i32
    %c0_i32_0 = arith.constant 0 : i32
    %c0_i32_1 = arith.constant 0 : i32
    return %c0_i32, %c0_i32_0 : i32, i32
  }
  func.func @transform_2(%arg0: i32) -> (i32, i32) {
    %c0_i32 = arith.constant 0 : i32
    %c0_i32_0 = arith.constant 0 : i32
    %c0_i32_1 = arith.constant 0 : i32
    return %c0_i32, %c0_i32_0 : i32, i32
  }
  func.func @transform_3(%arg0: i32) -> (i32, i32) {
    %c0_i32 = arith.constant 0 : i32
    %c0_i32_0 = arith.constant 0 : i32
    %c0_i32_1 = arith.constant 0 : i32
    return %c0_i32, %c0_i32_0 : i32, i32
  }
  func.func @transform_4(%arg0: i32) -> (i32, i32) {
    %c0_i32 = arith.constant 0 : i32
    %c0_i32_0 = arith.constant 0 : i32
    return %arg0, %c0_i32 : i32, i32
  }
}

</mosaic_0001>

<llo_original>
// kernel: tpu_custom_call.1
$region0: #{tpu_custom_call.1}
  #allocation0 [shape = 'u32[]', space=smem, size = 0x4, offset = 0x4, fixed_abs, tag = 'smem constant byte address 0x4 - core index']
  #allocation1 [shape = 'u32[144,128]{1,0:T(1,128)}', space=vmem, size = 0x12000, scoped, tag = 'internal scratch']
  %s0 = inlined_call_operand.hbm [shape: f32[4,128], index: 0, kind: input, shape index: {}]
  %s1 = inlined_call_operand.vmem [shape: f32[1,128], index: 1, kind: input, shape index: {}]
  %s2 = inlined_call_operand.vmem [shape: f32[1,128], index: 2, kind: input, shape index: {}]
  %s3 = inlined_call_operand.hbm [shape: bf16[128,128], index: 3, kind: input, shape index: {}]
  %s4 = inlined_call_operand.hbm [shape: f32[4,128], index: 4, kind: output, shape index: {}]
  %s5 = sld [smem:[#allocation0]]
  $region34: #{tpu_custom_call.1} parent=0
    _
  %s7 = ssub.s32 1, %s5
  %s8 = scalar_select 0, %s7, %s5
  $region1: #{tpu_custom_call.1} parent=0
    #allocation2 [shape = 'u8[2048]{0}', space=vmem, size = 0x800, scoped, tag = 'input window, operand 0, single buffered']
    #allocation3 [shape = 's32[1]{0}', space=sflag, size = 0x4, scoped, tag = 'scoped memory for tpu_custom_call.1']
    #allocation4 [shape = 's32[1]{0}', space=sflag, size = 0x4, scoped, tag = 'scoped memory for tpu_custom_call.1']
    #allocation5 [shape = 'u8[32768]{0}', space=vmem, size = 0x8000, scoped, tag = 'input window, operand 3, single buffered']
    #allocation6 [shape = 's32[1]{0}', space=sflag, size = 0x4, scoped, tag = 'scoped memory for tpu_custom_call.1']
    #allocation7 [shape = 'u8[2048]{0}', space=vmem, size = 0x800, scoped, tag = 'output window, operand 0, single buffered']
    %9 = vsyncpa [#allocation3], 0
    %10 = vsyncpa [#allocation6], 0
    %11 = vsyncpa [#allocation4], 0
    // Predicated region
    $region2: #{tpu_custom_call.1} parent=1 // pred_check
      _
    $region3: #{tpu_custom_call.1} parent=1 // pred_check_branch
      %13 = sbr.rel (0) target = $region5
    $region4: #{tpu_custom_call.1} parent=1 // pred_region
      %s15 = ssub.s32 64, 64
      %16 = vsyncadd [#allocation3], %s15
      %s18 = sshll.u32 [#allocation2], 4
      %s19 = int_to_ptr.vmem [resolvable:$true] %s18
      %21 = dma.hbm_to_vmem [thread:$0]  %s0, 64, %s19, [#allocation3]
    $region5: #{tpu_custom_call.1} parent=1 // pred_fallthru
      _
    // Predicated region
    $region6: #{tpu_custom_call.1} parent=1 // pred_check
      _
    $region7: #{tpu_custom_call.1} parent=1 // pred_check_branch
      %23 = sbr.rel (0) target = $region9
    $region8: #{tpu_custom_call.1} parent=1 // pred_region
      _
    $region9: #{tpu_custom_call.1} parent=1 // pred_fallthru
      _
    // Predicated region
    $region10: #{tpu_custom_call.1} parent=1 // pred_check
      _
    $region11: #{tpu_custom_call.1} parent=1 // pred_check_branch
      %25 = sbr.rel (0) target = $region13
    $region12: #{tpu_custom_call.1} parent=1 // pred_region
      _
    $region13: #{tpu_custom_call.1} parent=1 // pred_fallthru
      _
    // Predicated region
    $region14: #{tpu_custom_call.1} parent=1 // pred_check
      _
    $region15: #{tpu_custom_call.1} parent=1 // pred_check_branch
      %27 = sbr.rel (0) target = $region17
    $region16: #{tpu_custom_call.1} parent=1 // pred_region
      %s29 = ssub.s32 1024, 1024
      %30 = vsyncadd [#allocation6], %s29
      %s31 = sshll.u32 [#allocation5], 4
      %s32 = int_to_ptr.vmem [resolvable:$true] %s31
      %37 = dma.hbm_to_vmem [thread:$0]  %s3, 1024, %s32, [#allocation6], 64, 64, 4
    $region17: #{tpu_custom_call.1} parent=1 // pred_fallthru
      _
    // Predicated region
    $region18: #{tpu_custom_call.1} parent=1 // pred_check
      _
    $region19: #{tpu_custom_call.1} parent=1 // pred_check_branch
      %39 = sbr.rel (0) target = $region21
    $region20: #{tpu_custom_call.1} parent=1 // pred_region
      %40 = dma.done [#allocation3], 64
    $region21: #{tpu_custom_call.1} parent=1 // pred_fallthru
      _
    // Predicated region
    $region22: #{tpu_custom_call.1} parent=1 // pred_check
      _
    $region23: #{tpu_custom_call.1} parent=1 // pred_check_branch
      %42 = sbr.rel (0) target = $region25
    $region24: #{tpu_custom_call.1} parent=1 // pred_region
      %43 = dma.done [#allocation6], 1024
    $region25: #{tpu_custom_call.1} parent=1 // pred_fallthru
      _
    %v45 = vld [vmem:[#allocation2] sm:$0xf]
    %v46 = vld [vmem:[#allocation5] sm:$0xf]
    %v47 = vld [vmem:[#allocation5 + $0x4] sm:$0xf]
    %v48 = vld [vmem:[#allocation5 + $0x8] sm:$0xf]
    %v49 = vld [vmem:[#allocation5 + $0xc] sm:$0xf]
    %v50 = vld [vmem:[#allocation5 + $0x10] sm:$0xf]
    %v51 = vld [vmem:[#allocation5 + $0x14] sm:$0xf]
    %v52 = vld [vmem:[#allocation5 + $0x18] sm:$0xf]
    %v53 = vld [vmem:[#allocation5 + $0x1c] sm:$0xf]
    %v54 = vld [vmem:[#allocation5 + $0x20] sm:$0xf]
    %v55 = vld [vmem:[#allocation5 + $0x24] sm:$0xf]
    %v56 = vld [vmem:[#allocation5 + $0x28] sm:$0xf]
    %v57 = vld [vmem:[#allocation5 + $0x2c] sm:$0xf]
    %v58 = vld [vmem:[#allocation5 + $0x30] sm:$0xf]
    %v59 = vld [vmem:[#allocation5 + $0x34] sm:$0xf]
    %v60 = vld [vmem:[#allocation5 + $0x38] sm:$0xf]
    %v61 = vld [vmem:[#allocation5 + $0x3c] sm:$0xf]
    %v62 = vpack.c.bf16 %v45, %v45
    %v63 = vunpack.c.l.bf16 %v62
    %v64 = vsub.f32 %v45, %v63
    %v65 = vpack.c.bf16 %v64, %v64
    %v82 = vunpack.c.l.b16 %v46
    %v83 = vunpack.c.l.b16 %v47
    %v84 = vunpack.c.l.b16 %v48
    %v85 = vunpack.c.l.b16 %v49
    %v86 = vunpack.c.l.b16 %v50
    %v87 = vunpack.c.l.b16 %v51
    %v88 = vunpack.c.l.b16 %v52
    %v89 = vunpack.c.l.b16 %v53
    %v90 = vunpack.c.l.b16 %v54
    %v91 = vunpack.c.l.b16 %v55
    %v92 = vunpack.c.l.b16 %v56
    %v93 = vunpack.c.l.b16 %v57
    %v94 = vunpack.c.l.b16 %v58
    %v95 = vunpack.c.l.b16 %v59
    %v96 = vunpack.c.l.b16 %v60
    %v97 = vunpack.c.l.b16 %v61
    %v98 = vpack.c.b16 %v83, %v82
    %v99 = vpack.c.b16 %v85, %v84
    %v100 = vpack.c.b16 %v87, %v86
    %v101 = vpack.c.b16 %v89, %v88
    %v102 = vpack.c.b16 %v91, %v90
    %v103 = vpack.c.b16 %v93, %v92
    %v104 = vpack.c.b16 %v95, %v94
    %v105 = vpack.c.b16 %v97, %v96
    %114 = vmatprep.subr.bf16.mxu0 0
    %115 = vmatpush1.bf16.msra.mxu0 %v105
    %116 = vmatprep.subr.bf16.mxu0 0
    %117 = vmatpush1.bf16.msra.mxu0 %v104
    %118 = vmatprep.subr.bf16.mxu0 0
    %119 = vmatpush1.bf16.msra.mxu0 %v103
    %120 = vmatprep.subr.bf16.mxu0 0
    %121 = vmatpush1.bf16.msra.mxu0 %v102
    %122 = vmatprep.subr.bf16.mxu0 0
    %123 = vmatpush1.bf16.msra.mxu0 %v101
    %124 = vmatprep.subr.bf16.mxu0 0
    %125 = vmatpush1.bf16.msra.mxu0 %v100
    %126 = vmatprep.subr.bf16.mxu0 0
    %127 = vmatpush1.bf16.msra.mxu0 %v99
    %128 = vmatprep.subr.bf16.mxu0 0
    %129 = vmatpush1.bf16.msra.mxu0 %v98
    %130 = vmatprep.subr.bf16.mxu0 0
    %131 = vmatpush2.bf16.msra.mxu0 0
    %132 = vmatprep.subr.bf16.mxu0 0
    %133 = vmatpush2.bf16.msra.mxu0 0
    %134 = vmatprep.subr.bf16.mxu0 0
    %135 = vmatpush2.bf16.msra.mxu0 0
    %136 = vmatprep.subr.bf16.mxu0 0
    %137 = vmatpush2.bf16.msra.mxu0 0
    %138 = vmatprep.subr.bf16.mxu0 0
    %139 = vmatpush2.bf16.msra.mxu0 0
    %140 = vmatprep.subr.bf16.mxu0 0
    %141 = vmatpush2.bf16.msra.mxu0 0
    %142 = vmatprep.subr.bf16.mxu0 0
    %143 = vmatpush2.bf16.msra.mxu0 0
    %144 = vmatprep.subr.bf16.mxu0 0
    %145 = vmatpush2.bf16.msra.mxu0 0
    %146 = vmatprep.mubr.bf16.mxu0 0
    %147 = vmatmul.mubr.bf16.gmra.mxu0 %v65
    %v148 = vpop.f32.mrf.mxu0
    %v149 = vadd.f32 0.0, %v148
    %v150 = vpop.f32.mrf.mxu0
    %v151 = vpop.f32.mrf.mxu0
    %v152 = vpop.f32.mrf.mxu0
    %153 = vdwg.mxu0
    %154 = vmatprep.subr.bf16.mxu0 0
    %155 = vmatpush1.bf16.msra.mxu0 %v105
    %156 = vmatprep.subr.bf16.mxu0 0
    %157 = vmatpush1.bf16.msra.mxu0 %v104
    %158 = vmatprep.subr.bf16.mxu0 0
    %159 = vmatpush1.bf16.msra.mxu0 %v103
    %160 = vmatprep.subr.bf16.mxu0 0
    %161 = vmatpush1.bf16.msra.mxu0 %v102
    %162 = vmatprep.subr.bf16.mxu0 0
    %163 = vmatpush1.bf16.msra.mxu0 %v101
    %164 = vmatprep.subr.bf16.mxu0 0
    %165 = vmatpush1.bf16.msra.mxu0 %v100
    %166 = vmatprep.subr.bf16.mxu0 0
    %167 = vmatpush1.bf16.msra.mxu0 %v99
    %168 = vmatprep.subr.bf16.mxu0 0
    %169 = vmatpush1.bf16.msra.mxu0 %v98
    %170 = vmatprep.subr.bf16.mxu0 0
    %171 = vmatpush2.bf16.msra.mxu0 0
    %172 = vmatprep.subr.bf16.mxu0 0
    %173 = vmatpush2.bf16.msra.mxu0 0
    %174 = vmatprep.subr.bf16.mxu0 0
    %175 = vmatpush2.bf16.msra.mxu0 0
    %176 = vmatprep.subr.bf16.mxu0 0
    %177 = vmatpush2.bf16.msra.mxu0 0
    %178 = vmatprep.subr.bf16.mxu0 0
    %179 = vmatpush2.bf16.msra.mxu0 0
    %180 = vmatprep.subr.bf16.mxu0 0
    %181 = vmatpush2.bf16.msra.mxu0 0
    %182 = vmatprep.subr.bf16.mxu0 0
    %183 = vmatpush2.bf16.msra.mxu0 0
    %184 = vmatprep.subr.bf16.mxu0 0
    %185 = vmatpush2.bf16.msra.mxu0 0
    %186 = vmatprep.mubr.bf16.mxu0 0
    %187 = vmatmul.mubr.bf16.gmra.mxu0 %v62
    %v188 = vpop.f32.mrf.mxu0
    %v189 = vadd.f32 %v149, %v188
    %v190 = vpop.f32.mrf.mxu0
    %v191 = vpop.f32.mrf.mxu0
    %v192 = vpop.f32.mrf.mxu0
    %193 = vdwg.mxu0
    %v194 = vmul.f32 %v189, 0.03125
    %v195 = vsub.f32 %v45, %v194
    %v196 = vmul.f32 %v195, %v195
    %v197 = vpack.c.bf16 %v196, %v196
    %v198 = vunpack.c.l.bf16 %v197
    %v199 = vsub.f32 %v196, %v198
    %v200 = vpack.c.bf16 %v199, %v199
    %201 = vmatprep.subr.bf16.mxu0 0
    %202 = vmatpush1.bf16.msra.mxu0 %v105
    %203 = vmatprep.subr.bf16.mxu0 0
    %204 = vmatpush1.bf16.msra.mxu0 %v104
    %205 = vmatprep.subr.bf16.mxu0 0
    %206 = vmatpush1.bf16.msra.mxu0 %v103
    %207 = vmatprep.subr.bf16.mxu0 0
    %208 = vmatpush1.bf16.msra.mxu0 %v102
    %209 = vmatprep.subr.bf16.mxu0 0
    %210 = vmatpush1.bf16.msra.mxu0 %v101
    %211 = vmatprep.subr.bf16.mxu0 0
    %212 = vmatpush1.bf16.msra.mxu0 %v100
    %213 = vmatprep.subr.bf16.mxu0 0
    %214 = vmatpush1.bf16.msra.mxu0 %v99
    %215 = vmatprep.subr.bf16.mxu0 0
    %216 = vmatpush1.bf16.msra.mxu0 %v98
    %217 = vmatprep.subr.bf16.mxu0 0
    %218 = vmatpush2.bf16.msra.mxu0 0
    %219 = vmatprep.subr.bf16.mxu0 0
    %220 = vmatpush2.bf16.msra.mxu0 0
    %221 = vmatprep.subr.bf16.mxu0 0
    %222 = vmatpush2.bf16.msra.mxu0 0
    %223 = vmatprep.subr.bf16.mxu0 0
    %224 = vmatpush2.bf16.msra.mxu0 0
    %225 = vmatprep.subr.bf16.mxu0 0
    %226 = vmatpush2.bf16.msra.mxu0 0
    %227 = vmatprep.subr.bf16.mxu0 0
    %228 = vmatpush2.bf16.msra.mxu0 0
    %229 = vmatprep.subr.bf16.mxu0 0
    %230 = vmatpush2.bf16.msra.mxu0 0
    %231 = vmatprep.subr.bf16.mxu0 0
    %232 = vmatpush2.bf16.msra.mxu0 0
    %233 = vmatprep.mubr.bf16.mxu0 0
    %234 = vmatmul.mubr.bf16.gmra.mxu0 %v200
    %v235 = vpop.f32.mrf.mxu0
    %v236 = vadd.f32 0.0, %v235
    %v237 = vpop.f32.mrf.mxu0
    %v238 = vpop.f32.mrf.mxu0
    %v239 = vpop.f32.mrf.mxu0
    %240 = vdwg.mxu0
    %241 = vmatprep.subr.bf16.mxu0 0
    %242 = vmatpush1.bf16.msra.mxu0 %v105
    %243 = vmatprep.subr.bf16.mxu0 0
    %244 = vmatpush1.bf16.msra.mxu0 %v104
    %245 = vmatprep.subr.bf16.mxu0 0
    %246 = vmatpush1.bf16.msra.mxu0 %v103
    %247 = vmatprep.subr.bf16.mxu0 0
    %248 = vmatpush1.bf16.msra.mxu0 %v102
    %249 = vmatprep.subr.bf16.mxu0 0
    %250 = vmatpush1.bf16.msra.mxu0 %v101
    %251 = vmatprep.subr.bf16.mxu0 0
    %252 = vmatpush1.bf16.msra.mxu0 %v100
    %253 = vmatprep.subr.bf16.mxu0 0
    %254 = vmatpush1.bf16.msra.mxu0 %v99
    %255 = vmatprep.subr.bf16.mxu0 0
    %256 = vmatpush1.bf16.msra.mxu0 %v98
    %257 = vmatprep.subr.bf16.mxu0 0
    %258 = vmatpush2.bf16.msra.mxu0 0
    %259 = vmatprep.subr.bf16.mxu0 0
    %260 = vmatpush2.bf16.msra.mxu0 0
    %261 = vmatprep.subr.bf16.mxu0 0
    %262 = vmatpush2.bf16.msra.mxu0 0
    %263 = vmatprep.subr.bf16.mxu0 0
    %264 = vmatpush2.bf16.msra.mxu0 0
    %265 = vmatprep.subr.bf16.mxu0 0
    %266 = vmatpush2.bf16.msra.mxu0 0
    %267 = vmatprep.subr.bf16.mxu0 0
    %268 = vmatpush2.bf16.msra.mxu0 0
    %269 = vmatprep.subr.bf16.mxu0 0
    %270 = vmatpush2.bf16.msra.mxu0 0
    %271 = vmatprep.subr.bf16.mxu0 0
    %272 = vmatpush2.bf16.msra.mxu0 0
    %273 = vmatprep.mubr.bf16.mxu0 0
    %274 = vmatmul.mubr.bf16.gmra.mxu0 %v197
    %v275 = vpop.f32.mrf.mxu0
    %v276 = vadd.f32 %v236, %v275
    %v277 = vpop.f32.mrf.mxu0
    %v278 = vpop.f32.mrf.mxu0
    %v279 = vpop.f32.mrf.mxu0
    %280 = vdwg.mxu0
    %v281 = vmul.f32 %v276, 0.032258064
    %v282 = vrsqrt.pop %v281
    %v283 = vmul.f32 %v281, %v282
    %vm284 = vcmp.eq.f32.partialorder %v281, inf
    %v285 = vsel %vm284, %v281, %v283
    %vm286 = vcmp.eq.f32.partialorder %v281, 0.0
    %v287 = vand.u32 %v281, 2147483648
    %v288 = vsel %vm286, %v287, %v285
    %v289 = vadd.f32 %v288, 1e-06
    %v290 = vrcp.pop %v289
    %v291 = vld [vmem:[%s1] sm:$0x1]
    %v293 = vlaneseq
    %v294 = vshrl.u32 %v293, 7
    %v295 = vsub.s32 0, %v294
    %v296 = vrot.slane %v291, %v295
    %v298 = vmul.f32 %v296, %v290
    %v299 = vmul.f32 %v195, %v298
    %v300 = vld [vmem:[%s2] sm:$0x1]
    %v302 = vlaneseq
    %v303 = vshrl.u32 %v302, 7
    %v304 = vsub.s32 0, %v303
    %v305 = vrot.slane %v300, %v304
    %v307 = vadd.f32 %v299, %v305
    %308 = vst [vmem:[#allocation7] sm:$0xf] %v307
    // Predicated region
    $region26: #{tpu_custom_call.1} parent=1 // pred_check
      _
    $region27: #{tpu_custom_call.1} parent=1 // pred_check_branch
      %310 = sbr.rel (0) target = $region29
    $region28: #{tpu_custom_call.1} parent=1 // pred_region
      %s312 = ssub.s32 64, 64
      %313 = vsyncadd [#allocation4], %s312
      %s315 = sshll.u32 [#allocation7], 4
      %s316 = int_to_ptr.vmem [resolvable:$true] %s315
      %318 = dma.vmem_to_hbm [thread:$0]  %s316, 64, %s4, [#allocation4]
    $region29: #{tpu_custom_call.1} parent=1 // pred_fallthru
      _
    // Predicated region
    $region30: #{tpu_custom_call.1} parent=1 // pred_check
      _
    $region31: #{tpu_custom_call.1} parent=1 // pred_check_branch
      %320 = sbr.rel (0) target = $region33
    $region32: #{tpu_custom_call.1} parent=1 // pred_region
      %321 = dma.done [#allocation4], 64
    $region33: #{tpu_custom_call.1} parent=1 // pred_fallthru
      _
    %322 = vsyncpa [#allocation3], 1
    %323 = vsyncpa [#allocation6], 1
    %324 = vsyncpa [#allocation4], 1

</llo_original>
